<compile_context>
chip_gen: v7x
topology: tpu7x:2x2x1
jax: 0.10.0
libtpu: 0.0.40
codegen_flags: <defaults>
</compile_context>

<pallas_src>
import itertools
import numpy as np

import jax
import jax.numpy as jnp
from jax import lax
from jax.experimental import pallas as pl
from jax.experimental.pallas import tpu as pltpu

SUBLANES = 8      # minimal sublane group (f32 vreg = 8 x 128)
LANES = 128       # lane width
NS_ITERS = 40     # Newton-Schulz iterations (quadratic convergence)


def _plan_tiles(batch):
    """Pick (sublane_block, padded_batch, grid_len) for the solve kernel.

    Blocks are as large as reasonable (up to ~64 sublanes x 128 lanes) to
    amortize the ~0.35us per-grid-step overhead and keep stores lane-dense.
    The grid is kept EVEN (and >= 4 when there is enough work) so v7x's two
    TensorCores get a balanced split; register pressure is handled by the
    in-kernel sub-row loop, NOT by shrinking the DMA block.  VMEM per block
    stays ~1 MiB double-buffered, fine on every generation (incl. v7x 64 MiB).
    """
    n8 = max(1, -(-batch // (SUBLANES * LANES)))   # number of (8x128) groups
    if n8 == 1:
        grid = 1
    else:
        grid = max(2, -(-n8 // 8))                 # cap blocks near 64 sublanes
        if n8 >= 16:
            grid = max(grid, 4)                    # >=2 steps per v7x core
        if grid % 2:
            grid += 1                              # even split across 2 TCs
    mult = -(-n8 // grid)
    sb = SUBLANES * mult
    padded = grid * sb * LANES
    return sb, padded, grid


def make_pinv_solve_kernel(k: int, margin: float, ns_iters: int, sub_rows: int):
    """Kernel: a_ref (k, k, SB, 128), y_ref (k, SB, 128) -> w_ref (k, SB, 128).

    Runs the full NS recurrence per (8,128) sub-row so the loop-carried state
    is one vreg per plane (~2*k^2 + k live vregs) -> no spills.
    """

    def kernel(a_ref, y_ref, w_ref):

        @pl.loop(0, sub_rows)
        def _(r):
            r0 = pl.multiple_of(r * SUBLANES, SUBLANES)

            def load_a(i, j):
                # Re-loaded at every use; VMEM loads are hidden under the
                # VALU-bound NS loop and nothing stays pinned in vregs.
                return a_ref[i, j, pl.ds(r0, SUBLANES), :]

            # alpha = 1 / (||A||_1 * ||A||_inf), per system.  The |A| planes
            # die right after the norms (nothing live across the NS loop).
            col_sums = [None] * k
            row_sums = [None] * k
            for i in range(k):
                for j in range(k):
                    ab = jnp.abs(load_a(i, j))
                    col_sums[j] = ab if col_sums[j] is None else col_sums[j] + ab
                    row_sums[i] = ab if row_sums[i] is None else row_sums[i] + ab
            norm1, norminf = col_sums[0], row_sums[0]
            for t in range(1, k):
                norm1 = jnp.maximum(norm1, col_sums[t])
                norminf = jnp.maximum(norminf, row_sums[t])
            # EUP approximate reciprocal (free slot); NS self-corrects init
            # error, and alpha <= ~1/sigma_max^2 keeps convergence guaranteed.
            alpha = pl.reciprocal(norm1 * norminf + 1e-30, approx=True)

            # X0 = alpha * A^T, flat row-major tuple of (8, 128) planes.
            x0 = tuple(alpha * load_a(j, i) for i in range(k) for j in range(k))

            def ns_body(_, X):
                Xm = [[X[i * k + j] for j in range(k)] for i in range(k)]
                xn = [None] * (k * k)
                # Column-by-column: build T[:, l] right before producing
                # X_new[:, l]; peak live planes ~ 2*k^2 + k.
                for l in range(k):
                    tcol = []
                    for m in range(k):
                        s = load_a(m, 0) * Xm[0][l]
                        for p in range(1, k):
                            s = s + load_a(m, p) * Xm[p][l]
                        tcol.append(s)
                    for i in range(k):
                        s = Xm[i][0] * tcol[0]
                        for m in range(1, k):
                            s = s + Xm[i][m] * tcol[m]
                        xn[i * k + l] = 2.0 * Xm[i][l] - s
                return tuple(xn)

            # Serially dependent -> no unroll (unrolling only doubles code
            # size and live ranges at the seam).
            X = lax.fori_loop(0, ns_iters, ns_body, x0)

            # w = pinv(A) @ (y - margin); y only touched after the NS loop.
            for i in range(k):
                s = X[i * k] * (y_ref[0, pl.ds(r0, SUBLANES), :] - margin)
                for m in range(1, k):
                    s = s + X[i * k + m] * (y_ref[m, pl.ds(r0, SUBLANES), :] - margin)
                w_ref[i, pl.ds(r0, SUBLANES), :] = s

    return kernel


def pinv_solve(a_in, y_in, k: int, margin: float, sb: int, ns_iters: int = NS_ITERS):
    """a_in: (k, k, G, 128) f32, y_in: (k, G, 128) f32 -> (k, G, 128) f32."""
    _, _, g, _ = a_in.shape
    assert g % sb == 0
    grid = (g // sb,)
    sub_rows = sb // SUBLANES
    bp = g * LANES
    cost = pl.CostEstimate(
        flops=int(bp) * ns_iters * 4 * k ** 3,
        transcendentals=int(bp),
        bytes_accessed=int(bp) * (k * k + 2 * k) * 4,
    )
    return pl.pallas_call(
        make_pinv_solve_kernel(k, margin, ns_iters, sub_rows),
        out_shape=jax.ShapeDtypeStruct((k, g, LANES), jnp.float32),
        grid_spec=pltpu.PrefetchScalarGridSpec(
            num_scalar_prefetch=0,
            grid=grid,
            in_specs=[
                pl.BlockSpec((k, k, sb, LANES), lambda b: (0, 0, b, 0)),
                pl.BlockSpec((k, sb, LANES), lambda b: (0, b, 0)),
            ],
            out_specs=pl.BlockSpec((k, sb, LANES), lambda b: (0, b, 0)),
        ),
        compiler_params=pltpu.CompilerParams(dimension_semantics=("parallel",)),
        cost_estimate=cost,
    )(a_in, y_in)


class RobustSparseHalfspaceLearnerPallas:
    """JAX/Pallas port of RobustSparseHalfspaceLearner (forward pass)."""

    def __init__(self, prev_header: str, sparsity: int, margin: float):
        self.header = " ".join([prev_header, "robust list learner", "-"])
        self.sparsity = int(sparsity)
        self.margin = float(margin)

    # index generation is pure glue (host-side, static shapes)
    def indices_combinations(self, degree: int, prev_indices, num: int) -> np.ndarray:
        prev = np.asarray(prev_indices, dtype=np.int64).reshape(-1)
        valid = np.arange(num, dtype=np.int64)
        valid = valid[~np.isin(valid, prev)]
        if valid.shape[0] <= degree:
            return np.concatenate([prev, valid])[None, :]
        partial = np.array(list(itertools.combinations(valid.tolist(), degree)),
                           dtype=np.int64)
        if prev.shape[0] <= 0:
            return partial
        return np.concatenate([np.tile(prev, (partial.shape[0], 1)), partial], axis=1)

    def forward(self, labels, features, prev_sample_indices, prev_feature_indices,
                return_aux: bool = False):
        k = self.sparsity
        n, d = features.shape
        labels_pm = 2.0 * labels - 1.0

        sample_comb = self.indices_combinations(
            k - len(prev_sample_indices), prev_sample_indices, n)       # (S, k)
        feat_comb = self.indices_combinations(
            k - len(prev_feature_indices), prev_feature_indices, d)     # (F, k)
        S, F = sample_comb.shape[0], feat_comb.shape[0]
        B = F * S

        s_idx = jnp.asarray(sample_comb)                                # (S, k)
        f_idx = jnp.asarray(feat_comb)                                  # (F, k)
        lf = labels_pm[:, None] * features                              # (n, d)

        # Gather A directly in the kernel's (k, k, batch) layout (no (B,k,k)
        # transpose):  a_kkb[i, j, f*S + s] = lf[sample_comb[s, i], feat_comb[f, j]]
        a_kkb = lf[s_idx.T[:, None, None, :], f_idx.T[None, :, :, None]]  # (k,k,F,S)
        a_kkb = a_kkb.reshape(k, k, B).astype(jnp.float32)
        y_ks = labels_pm[s_idx.T]                                         # (k, S)
        y_kb = jnp.broadcast_to(
            y_ks[:, None, :], (k, F, S)).reshape(k, B).astype(jnp.float32)

        # Pad the batch with benign identity systems (solution = -margin,
        # sliced off below) to fill whole blocks.
        sb, bp, _ = _plan_tiles(B)
        pad = bp - B
        if pad:
            eye_pad = jnp.broadcast_to(
                jnp.eye(k, dtype=jnp.float32)[:, :, None], (k, k, pad))
            a_pad = jnp.concatenate([a_kkb, eye_pad], axis=-1)
            y_pad = jnp.concatenate(
                [y_kb, jnp.zeros((k, pad), jnp.float32)], axis=-1)
        else:
            a_pad, y_pad = a_kkb, y_kb
        g = bp // LANES
        a_in = a_pad.reshape(k, k, g, LANES)
        y_in = y_pad.reshape(k, g, LANES)

        w = pinv_solve(a_in, y_in, k, self.margin, sb)                   # (k, g, 128)
        weight_list = w.reshape(k, bp).T[:B]                             # (B, k)

        # Sparse-COO equivalent of to_sparse_tensor: per-row column indices.
        col_idx = jnp.repeat(f_idx, B // F, axis=0)                      # (B, k)
        out = {"weights": weight_list, "col_indices": col_idx}

        if return_aux:
            # TODO(synk): torch.sparse_coo_tensor has no Pallas/JAX-sparse
            #   analogue; the dense scatter / A copies are only built on request.
            dense = jnp.zeros((B, d), jnp.float32).at[
                jnp.arange(B)[:, None], col_idx].set(weight_list)
            out["dense"] = dense
            out["A"] = jnp.transpose(a_kkb, (2, 0, 1))                   # (B, k, k)
            out["labels_comb"] = y_kb.T                                  # (B, k)
        return out


if __name__ == "__main__":
    key = jax.random.PRNGKey(0)
    n, d = 8, 6
    sparsity, margin = 3, 0.5

    kf, kl = jax.random.split(key)
    features = jax.random.normal(kf, (n, d), dtype=jnp.float32)
    labels = (jax.random.uniform(kl, (n,)) > 0.5).astype(jnp.float32)  # {0, 1}
    prev_sample_indices = np.zeros((0,), np.int64)
    prev_feature_indices = np.zeros((0,), np.int64)

    learner = RobustSparseHalfspaceLearnerPallas("test", sparsity, margin)
    out = learner.forward(labels, features, prev_sample_indices,
                          prev_feature_indices, return_aux=True)
    jax.block_until_ready(out["weights"])
    jax.block_until_ready(out["dense"])

    # reference check against plain-JAX SVD-based pinv
    ref = jnp.matmul(jnp.linalg.pinv(out["A"]),
                     (out["labels_comb"] - margin)[..., None])[..., 0]
    err = float(jnp.max(jnp.abs(out["weights"] - ref)))
    scale = float(jnp.max(jnp.abs(ref))) + 1.0
    assert err <= 1e-2 * scale, f"pinv-solve mismatch: {err} vs scale {scale}"

    print("KERNEL_OK")
</pallas_src>

<mosaic_0001>
module attributes {stable_mosaic.version = 11 : i64} {
  func.func @kernel(%arg0: i32, %arg1: memref<3x3x8x128xf32, #tpu.memory_space<vmem>>, %arg2: memref<3x8x128xf32, #tpu.memory_space<vmem>>, %arg3: memref<3x8x128xf32, #tpu.memory_space<vmem>>) attributes {dimension_semantics = [#tpu.dimension_semantics<parallel>], iteration_bounds = array<i64: 2>, scalar_prefetch = 0 : i64, scratch_operands = 0 : i64, tpu.core_type = #tpu.core_type<tc>, window_params = [{transform_indices = @transform_0, window_bounds = array<i64: 3, 3, 8, 128>}, {transform_indices = @transform_1, window_bounds = array<i64: 3, 8, 128>}, {transform_indices = @transform_2, window_bounds = array<i64: 3, 8, 128>}]} {
    %c0_i32 = arith.constant 0 : i32
    %c1_i32 = arith.constant 1 : i32
    %0 = arith.muli %c0_i32, %c1_i32 : i32
    %c0_i32_0 = arith.constant 0 : i32
    %1 = arith.addi %c0_i32_0, %0 : i32
    %c8_i32 = arith.constant 8 : i32
    %2 = arith.muli %1, %c8_i32 : i32
    %3 = tpu.assume_multiple %2, 8 : i32
    %c0 = arith.constant 0 : index
    %c0_1 = arith.constant 0 : index
    %4 = arith.index_cast %3 : i32 to index
    %c0_2 = arith.constant 0 : index
    %5 = vector.load %arg1[%c0, %c0_1, %4, %c0_2] : memref<3x3x8x128xf32, #tpu.memory_space<vmem>>, vector<1x1x8x128xf32>
    %6 = vector.shape_cast %5 : vector<1x1x8x128xf32> to vector<8x128xf32>
    %7 = math.absf %6 : vector<8x128xf32>
    %c0_3 = arith.constant 0 : index
    %c1 = arith.constant 1 : index
    %8 = arith.index_cast %3 : i32 to index
    %c0_4 = arith.constant 0 : index
    %9 = vector.load %arg1[%c0_3, %c1, %8, %c0_4] : memref<3x3x8x128xf32, #tpu.memory_space<vmem>>, vector<1x1x8x128xf32>
    %10 = vector.shape_cast %9 : vector<1x1x8x128xf32> to vector<8x128xf32>
    %11 = math.absf %10 : vector<8x128xf32>
    %12 = arith.addf %7, %11 : vector<8x128xf32>
    %c0_5 = arith.constant 0 : index
    %c2 = arith.constant 2 : index
    %13 = arith.index_cast %3 : i32 to index
    %c0_6 = arith.constant 0 : index
    %14 = vector.load %arg1[%c0_5, %c2, %13, %c0_6] : memref<3x3x8x128xf32, #tpu.memory_space<vmem>>, vector<1x1x8x128xf32>
    %15 = vector.shape_cast %14 : vector<1x1x8x128xf32> to vector<8x128xf32>
    %16 = math.absf %15 : vector<8x128xf32>
    %17 = arith.addf %12, %16 : vector<8x128xf32>
    %c1_7 = arith.constant 1 : index
    %c0_8 = arith.constant 0 : index
    %18 = arith.index_cast %3 : i32 to index
    %c0_9 = arith.constant 0 : index
    %19 = vector.load %arg1[%c1_7, %c0_8, %18, %c0_9] : memref<3x3x8x128xf32, #tpu.memory_space<vmem>>, vector<1x1x8x128xf32>
    %20 = vector.shape_cast %19 : vector<1x1x8x128xf32> to vector<8x128xf32>
    %21 = math.absf %20 : vector<8x128xf32>
    %22 = arith.addf %7, %21 : vector<8x128xf32>
    %c1_10 = arith.constant 1 : index
    %c1_11 = arith.constant 1 : index
    %23 = arith.index_cast %3 : i32 to index
    %c0_12 = arith.constant 0 : index
    %24 = vector.load %arg1[%c1_10, %c1_11, %23, %c0_12] : memref<3x3x8x128xf32, #tpu.memory_space<vmem>>, vector<1x1x8x128xf32>
    %25 = vector.shape_cast %24 : vector<1x1x8x128xf32> to vector<8x128xf32>
    %26 = math.absf %25 : vector<8x128xf32>
    %27 = arith.addf %11, %26 : vector<8x128xf32>
    %28 = arith.addf %21, %26 : vector<8x128xf32>
    %c1_13 = arith.constant 1 : index
    %c2_14 = arith.constant 2 : index
    %29 = arith.index_cast %3 : i32 to index
    %c0_15 = arith.constant 0 : index
    %30 = vector.load %arg1[%c1_13, %c2_14, %29, %c0_15] : memref<3x3x8x128xf32, #tpu.memory_space<vmem>>, vector<1x1x8x128xf32>
    %31 = vector.shape_cast %30 : vector<1x1x8x128xf32> to vector<8x128xf32>
    %32 = math.absf %31 : vector<8x128xf32>
    %33 = arith.addf %16, %32 : vector<8x128xf32>
    %34 = arith.addf %28, %32 : vector<8x128xf32>
    %c2_16 = arith.constant 2 : index
    %c0_17 = arith.constant 0 : index
    %35 = arith.index_cast %3 : i32 to index
    %c0_18 = arith.constant 0 : index
    %36 = vector.load %arg1[%c2_16, %c0_17, %35, %c0_18] : memref<3x3x8x128xf32, #tpu.memory_space<vmem>>, vector<1x1x8x128xf32>
    %37 = vector.shape_cast %36 : vector<1x1x8x128xf32> to vector<8x128xf32>
    %38 = math.absf %37 : vector<8x128xf32>
    %39 = arith.addf %22, %38 : vector<8x128xf32>
    %c2_19 = arith.constant 2 : index
    %c1_20 = arith.constant 1 : index
    %40 = arith.index_cast %3 : i32 to index
    %c0_21 = arith.constant 0 : index
    %41 = vector.load %arg1[%c2_19, %c1_20, %40, %c0_21] : memref<3x3x8x128xf32, #tpu.memory_space<vmem>>, vector<1x1x8x128xf32>
    %42 = vector.shape_cast %41 : vector<1x1x8x128xf32> to vector<8x128xf32>
    %43 = math.absf %42 : vector<8x128xf32>
    %44 = arith.addf %27, %43 : vector<8x128xf32>
    %45 = arith.addf %38, %43 : vector<8x128xf32>
    %c2_22 = arith.constant 2 : index
    %c2_23 = arith.constant 2 : index
    %46 = arith.index_cast %3 : i32 to index
    %c0_24 = arith.constant 0 : index
    %47 = vector.load %arg1[%c2_22, %c2_23, %46, %c0_24] : memref<3x3x8x128xf32, #tpu.memory_space<vmem>>, vector<1x1x8x128xf32>
    %48 = vector.shape_cast %47 : vector<1x1x8x128xf32> to vector<8x128xf32>
    %49 = math.absf %48 : vector<8x128xf32>
    %50 = arith.addf %33, %49 : vector<8x128xf32>
    %51 = arith.addf %45, %49 : vector<8x128xf32>
    %52 = arith.maximumf %39, %44 : vector<8x128xf32>
    %53 = arith.maximumf %17, %34 : vector<8x128xf32>
    %54 = arith.maximumf %52, %50 : vector<8x128xf32>
    %55 = arith.maximumf %53, %51 : vector<8x128xf32>
    %56 = arith.mulf %54, %55 : vector<8x128xf32>
    %cst = arith.constant 1.000000e-30 : f32
    %57 = vector.broadcast %cst : f32 to vector<8x128xf32>
    %58 = arith.addf %56, %57 : vector<8x128xf32>
    %59 = tpu.reciprocal %58 {approx = true} : vector<8x128xf32> -> vector<8x128xf32>
    %c0_25 = arith.constant 0 : index
    %c0_26 = arith.constant 0 : index
    %60 = arith.index_cast %3 : i32 to index
    %c0_27 = arith.constant 0 : index
    %61 = vector.load %arg1[%c0_25, %c0_26, %60, %c0_27] : memref<3x3x8x128xf32, #tpu.memory_space<vmem>>, vector<1x1x8x128xf32>
    %62 = vector.shape_cast %61 : vector<1x1x8x128xf32> to vector<8x128xf32>
    %63 = arith.mulf %59, %62 : vector<8x128xf32>
    %c1_28 = arith.constant 1 : index
    %c0_29 = arith.constant 0 : index
    %64 = arith.index_cast %3 : i32 to index
    %c0_30 = arith.constant 0 : index
    %65 = vector.load %arg1[%c1_28, %c0_29, %64, %c0_30] : memref<3x3x8x128xf32, #tpu.memory_space<vmem>>, vector<1x1x8x128xf32>
    %66 = vector.shape_cast %65 : vector<1x1x8x128xf32> to vector<8x128xf32>
    %67 = arith.mulf %59, %66 : vector<8x128xf32>
    %c2_31 = arith.constant 2 : index
    %c0_32 = arith.constant 0 : index
    %68 = arith.index_cast %3 : i32 to index
    %c0_33 = arith.constant 0 : index
    %69 = vector.load %arg1[%c2_31, %c0_32, %68, %c0_33] : memref<3x3x8x128xf32, #tpu.memory_space<vmem>>, vector<1x1x8x128xf32>
    %70 = vector.shape_cast %69 : vector<1x1x8x128xf32> to vector<8x128xf32>
    %71 = arith.mulf %59, %70 : vector<8x128xf32>
    %c0_34 = arith.constant 0 : index
    %c1_35 = arith.constant 1 : index
    %72 = arith.index_cast %3 : i32 to index
    %c0_36 = arith.constant 0 : index
    %73 = vector.load %arg1[%c0_34, %c1_35, %72, %c0_36] : memref<3x3x8x128xf32, #tpu.memory_space<vmem>>, vector<1x1x8x128xf32>
    %74 = vector.shape_cast %73 : vector<1x1x8x128xf32> to vector<8x128xf32>
    %75 = arith.mulf %59, %74 : vector<8x128xf32>
    %c1_37 = arith.constant 1 : index
    %c1_38 = arith.constant 1 : index
    %76 = arith.index_cast %3 : i32 to index
    %c0_39 = arith.constant 0 : index
    %77 = vector.load %arg1[%c1_37, %c1_38, %76, %c0_39] : memref<3x3x8x128xf32, #tpu.memory_space<vmem>>, vector<1x1x8x128xf32>
    %78 = vector.shape_cast %77 : vector<1x1x8x128xf32> to vector<8x128xf32>
    %79 = arith.mulf %59, %78 : vector<8x128xf32>
    %c2_40 = arith.constant 2 : index
    %c1_41 = arith.constant 1 : index
    %80 = arith.index_cast %3 : i32 to index
    %c0_42 = arith.constant 0 : index
    %81 = vector.load %arg1[%c2_40, %c1_41, %80, %c0_42] : memref<3x3x8x128xf32, #tpu.memory_space<vmem>>, vector<1x1x8x128xf32>
    %82 = vector.shape_cast %81 : vector<1x1x8x128xf32> to vector<8x128xf32>
    %83 = arith.mulf %59, %82 : vector<8x128xf32>
    %c0_43 = arith.constant 0 : index
    %c2_44 = arith.constant 2 : index
    %84 = arith.index_cast %3 : i32 to index
    %c0_45 = arith.constant 0 : index
    %85 = vector.load %arg1[%c0_43, %c2_44, %84, %c0_45] : memref<3x3x8x128xf32, #tpu.memory_space<vmem>>, vector<1x1x8x128xf32>
    %86 = vector.shape_cast %85 : vector<1x1x8x128xf32> to vector<8x128xf32>
    %87 = arith.mulf %59, %86 : vector<8x128xf32>
    %c1_46 = arith.constant 1 : index
    %c2_47 = arith.constant 2 : index
    %88 = arith.index_cast %3 : i32 to index
    %c0_48 = arith.constant 0 : index
    %89 = vector.load %arg1[%c1_46, %c2_47, %88, %c0_48] : memref<3x3x8x128xf32, #tpu.memory_space<vmem>>, vector<1x1x8x128xf32>
    %90 = vector.shape_cast %89 : vector<1x1x8x128xf32> to vector<8x128xf32>
    %91 = arith.mulf %59, %90 : vector<8x128xf32>
    %c2_49 = arith.constant 2 : index
    %c2_50 = arith.constant 2 : index
    %92 = arith.index_cast %3 : i32 to index
    %c0_51 = arith.constant 0 : index
    %93 = vector.load %arg1[%c2_49, %c2_50, %92, %c0_51] : memref<3x3x8x128xf32, #tpu.memory_space<vmem>>, vector<1x1x8x128xf32>
    %94 = vector.shape_cast %93 : vector<1x1x8x128xf32> to vector<8x128xf32>
    %95 = arith.mulf %59, %94 : vector<8x128xf32>
    %c0_i32_52 = arith.constant 0 : i32
    %c40_i32 = arith.constant 40 : i32
    %96 = arith.addi %c0_i32_52, %c40_i32 : i32
    %c1_i32_53 = arith.constant 1 : i32
    %97:9 = scf.for %arg4 = %c0_i32_52 to %96 step %c1_i32_53 iter_args(%arg5 = %63, %arg6 = %67, %arg7 = %71, %arg8 = %75, %arg9 = %79, %arg10 = %83, %arg11 = %87, %arg12 = %91, %arg13 = %95) -> (vector<8x128xf32>, vector<8x128xf32>, vector<8x128xf32>, vector<8x128xf32>, vector<8x128xf32>, vector<8x128xf32>, vector<8x128xf32>, vector<8x128xf32>, vector<8x128xf32>)  : i32 {
      %c0_88 = arith.constant 0 : index
      %c0_89 = arith.constant 0 : index
      %170 = arith.index_cast %3 : i32 to index
      %c0_90 = arith.constant 0 : index
      %171 = vector.load %arg1[%c0_88, %c0_89, %170, %c0_90] : memref<3x3x8x128xf32, #tpu.memory_space<vmem>>, vector<1x1x8x128xf32>
      %172 = vector.shape_cast %171 : vector<1x1x8x128xf32> to vector<8x128xf32>
      %173 = arith.mulf %172, %arg5 : vector<8x128xf32>
      %c0_91 = arith.constant 0 : index
      %c1_92 = arith.constant 1 : index
      %174 = arith.index_cast %3 : i32 to index
      %c0_93 = arith.constant 0 : index
      %175 = vector.load %arg1[%c0_91, %c1_92, %174, %c0_93] : memref<3x3x8x128xf32, #tpu.memory_space<vmem>>, vector<1x1x8x128xf32>
      %176 = vector.shape_cast %175 : vector<1x1x8x128xf32> to vector<8x128xf32>
      %177 = arith.mulf %176, %arg8 : vector<8x128xf32>
      %178 = arith.addf %173, %177 : vector<8x128xf32>
      %c0_94 = arith.constant 0 : index
      %c2_95 = arith.constant 2 : index
      %179 = arith.index_cast %3 : i32 to index
      %c0_96 = arith.constant 0 : index
      %180 = vector.load %arg1[%c0_94, %c2_95, %179, %c0_96] : memref<3x3x8x128xf32, #tpu.memory_space<vmem>>, vector<1x1x8x128xf32>
      %181 = vector.shape_cast %180 : vector<1x1x8x128xf32> to vector<8x128xf32>
      %182 = arith.mulf %181, %arg11 : vector<8x128xf32>
      %183 = arith.addf %178, %182 : vector<8x128xf32>
      %c1_97 = arith.constant 1 : index
      %c0_98 = arith.constant 0 : index
      %184 = arith.index_cast %3 : i32 to index
      %c0_99 = arith.constant 0 : index
      %185 = vector.load %arg1[%c1_97, %c0_98, %184, %c0_99] : memref<3x3x8x128xf32, #tpu.memory_space<vmem>>, vector<1x1x8x128xf32>
      %186 = vector.shape_cast %185 : vector<1x1x8x128xf32> to vector<8x128xf32>
      %187 = arith.mulf %186, %arg5 : vector<8x128xf32>
      %c1_100 = arith.constant 1 : index
      %c1_101 = arith.constant 1 : index
      %188 = arith.index_cast %3 : i32 to index
      %c0_102 = arith.constant 0 : index
      %189 = vector.load %arg1[%c1_100, %c1_101, %188, %c0_102] : memref<3x3x8x128xf32, #tpu.memory_space<vmem>>, vector<1x1x8x128xf32>
      %190 = vector.shape_cast %189 : vector<1x1x8x128xf32> to vector<8x128xf32>
      %191 = arith.mulf %190, %arg8 : vector<8x128xf32>
      %192 = arith.addf %187, %191 : vector<8x128xf32>
      %c1_103 = arith.constant 1 : index
      %c2_104 = arith.constant 2 : index
      %193 = arith.index_cast %3 : i32 to index
      %c0_105 = arith.constant 0 : index
      %194 = vector.load %arg1[%c1_103, %c2_104, %193, %c0_105] : memref<3x3x8x128xf32, #tpu.memory_space<vmem>>, vector<1x1x8x128xf32>
      %195 = vector.shape_cast %194 : vector<1x1x8x128xf32> to vector<8x128xf32>
      %196 = arith.mulf %195, %arg11 : vector<8x128xf32>
      %197 = arith.addf %192, %196 : vector<8x128xf32>
      %c2_106 = arith.constant 2 : index
      %c0_107 = arith.constant 0 : index
      %198 = arith.index_cast %3 : i32 to index
      %c0_108 = arith.constant 0 : index
      %199 = vector.load %arg1[%c2_106, %c0_107, %198, %c0_108] : memref<3x3x8x128xf32, #tpu.memory_space<vmem>>, vector<1x1x8x128xf32>
      %200 = vector.shape_cast %199 : vector<1x1x8x128xf32> to vector<8x128xf32>
      %201 = arith.mulf %200, %arg5 : vector<8x128xf32>
      %c2_109 = arith.constant 2 : index
      %c1_110 = arith.constant 1 : index
      %202 = arith.index_cast %3 : i32 to index
      %c0_111 = arith.constant 0 : index
      %203 = vector.load %arg1[%c2_109, %c1_110, %202, %c0_111] : memref<3x3x8x128xf32, #tpu.memory_space<vmem>>, vector<1x1x8x128xf32>
      %204 = vector.shape_cast %203 : vector<1x1x8x128xf32> to vector<8x128xf32>
      %205 = arith.mulf %204, %arg8 : vector<8x128xf32>
      %206 = arith.addf %201, %205 : vector<8x128xf32>
      %c2_112 = arith.constant 2 : index
      %c2_113 = arith.constant 2 : index
      %207 = arith.index_cast %3 : i32 to index
      %c0_114 = arith.constant 0 : index
      %208 = vector.load %arg1[%c2_112, %c2_113, %207, %c0_114] : memref<3x3x8x128xf32, #tpu.memory_space<vmem>>, vector<1x1x8x128xf32>
      %209 = vector.shape_cast %208 : vector<1x1x8x128xf32> to vector<8x128xf32>
      %210 = arith.mulf %209, %arg11 : vector<8x128xf32>
      %211 = arith.addf %206, %210 : vector<8x128xf32>
      %212 = arith.mulf %arg5, %183 : vector<8x128xf32>
      %213 = arith.mulf %arg6, %197 : vector<8x128xf32>
      %214 = arith.addf %212, %213 : vector<8x128xf32>
      %215 = arith.mulf %arg7, %211 : vector<8x128xf32>
      %216 = arith.addf %214, %215 : vector<8x128xf32>
      %cst_115 = arith.constant 2.000000e+00 : f32
      %217 = vector.broadcast %cst_115 : f32 to vector<8x128xf32>
      %218 = arith.mulf %217, %arg5 : vector<8x128xf32>
      %219 = arith.subf %218, %216 : vector<8x128xf32>
      %220 = arith.mulf %arg8, %183 : vector<8x128xf32>
      %221 = arith.mulf %arg9, %197 : vector<8x128xf32>
      %222 = arith.addf %220, %221 : vector<8x128xf32>
      %223 = arith.mulf %arg10, %211 : vector<8x128xf32>
      %224 = arith.addf %222, %223 : vector<8x128xf32>
      %cst_116 = arith.constant 2.000000e+00 : f32
      %225 = vector.broadcast %cst_116 : f32 to vector<8x128xf32>
      %226 = arith.mulf %225, %arg8 : vector<8x128xf32>
      %227 = arith.subf %226, %224 : vector<8x128xf32>
      %228 = arith.mulf %arg11, %183 : vector<8x128xf32>
      %229 = arith.mulf %arg12, %197 : vector<8x128xf32>
      %230 = arith.addf %228, %229 : vector<8x128xf32>
      %231 = arith.mulf %arg13, %211 : vector<8x128xf32>
      %232 = arith.addf %230, %231 : vector<8x128xf32>
      %cst_117 = arith.constant 2.000000e+00 : f32
      %233 = vector.broadcast %cst_117 : f32 to vector<8x128xf32>
      %234 = arith.mulf %233, %arg11 : vector<8x128xf32>
      %235 = arith.subf %234, %232 : vector<8x128xf32>
      %c0_118 = arith.constant 0 : index
      %c0_119 = arith.constant 0 : index
      %236 = arith.index_cast %3 : i32 to index
      %c0_120 = arith.constant 0 : index
      %237 = vector.load %arg1[%c0_118, %c0_119, %236, %c0_120] : memref<3x3x8x128xf32, #tpu.memory_space<vmem>>, vector<1x1x8x128xf32>
      %238 = vector.shape_cast %237 : vector<1x1x8x128xf32> to vector<8x128xf32>
      %239 = arith.mulf %238, %arg6 : vector<8x128xf32>
      %c0_121 = arith.constant 0 : index
      %c1_122 = arith.constant 1 : index
      %240 = arith.index_cast %3 : i32 to index
      %c0_123 = arith.constant 0 : index
      %241 = vector.load %arg1[%c0_121, %c1_122, %240, %c0_123] : memref<3x3x8x128xf32, #tpu.memory_space<vmem>>, vector<1x1x8x128xf32>
      %242 = vector.shape_cast %241 : vector<1x1x8x128xf32> to vector<8x128xf32>
      %243 = arith.mulf %242, %arg9 : vector<8x128xf32>
      %244 = arith.addf %239, %243 : vector<8x128xf32>
      %c0_124 = arith.constant 0 : index
      %c2_125 = arith.constant 2 : index
      %245 = arith.index_cast %3 : i32 to index
      %c0_126 = arith.constant 0 : index
      %246 = vector.load %arg1[%c0_124, %c2_125, %245, %c0_126] : memref<3x3x8x128xf32, #tpu.memory_space<vmem>>, vector<1x1x8x128xf32>
      %247 = vector.shape_cast %246 : vector<1x1x8x128xf32> to vector<8x128xf32>
      %248 = arith.mulf %247, %arg12 : vector<8x128xf32>
      %249 = arith.addf %244, %248 : vector<8x128xf32>
      %c1_127 = arith.constant 1 : index
      %c0_128 = arith.constant 0 : index
      %250 = arith.index_cast %3 : i32 to index
      %c0_129 = arith.constant 0 : index
      %251 = vector.load %arg1[%c1_127, %c0_128, %250, %c0_129] : memref<3x3x8x128xf32, #tpu.memory_space<vmem>>, vector<1x1x8x128xf32>
      %252 = vector.shape_cast %251 : vector<1x1x8x128xf32> to vector<8x128xf32>
      %253 = arith.mulf %252, %arg6 : vector<8x128xf32>
      %c1_130 = arith.constant 1 : index
      %c1_131 = arith.constant 1 : index
      %254 = arith.index_cast %3 : i32 to index
      %c0_132 = arith.constant 0 : index
      %255 = vector.load %arg1[%c1_130, %c1_131, %254, %c0_132] : memref<3x3x8x128xf32, #tpu.memory_space<vmem>>, vector<1x1x8x128xf32>
      %256 = vector.shape_cast %255 : vector<1x1x8x128xf32> to vector<8x128xf32>
      %257 = arith.mulf %256, %arg9 : vector<8x128xf32>
      %258 = arith.addf %253, %257 : vector<8x128xf32>
      %c1_133 = arith.constant 1 : index
      %c2_134 = arith.constant 2 : index
      %259 = arith.index_cast %3 : i32 to index
      %c0_135 = arith.constant 0 : index
      %260 = vector.load %arg1[%c1_133, %c2_134, %259, %c0_135] : memref<3x3x8x128xf32, #tpu.memory_space<vmem>>, vector<1x1x8x128xf32>
      %261 = vector.shape_cast %260 : vector<1x1x8x128xf32> to vector<8x128xf32>
      %262 = arith.mulf %261, %arg12 : vector<8x128xf32>
      %263 = arith.addf %258, %262 : vector<8x128xf32>
      %c2_136 = arith.constant 2 : index
      %c0_137 = arith.constant 0 : index
      %264 = arith.index_cast %3 : i32 to index
      %c0_138 = arith.constant 0 : index
      %265 = vector.load %arg1[%c2_136, %c0_137, %264, %c0_138] : memref<3x3x8x128xf32, #tpu.memory_space<vmem>>, vector<1x1x8x128xf32>
      %266 = vector.shape_cast %265 : vector<1x1x8x128xf32> to vector<8x128xf32>
      %267 = arith.mulf %266, %arg6 : vector<8x128xf32>
      %c2_139 = arith.constant 2 : index
      %c1_140 = arith.constant 1 : index
      %268 = arith.index_cast %3 : i32 to index
      %c0_141 = arith.constant 0 : index
      %269 = vector.load %arg1[%c2_139, %c1_140, %268, %c0_141] : memref<3x3x8x128xf32, #tpu.memory_space<vmem>>, vector<1x1x8x128xf32>
      %270 = vector.shape_cast %269 : vector<1x1x8x128xf32> to vector<8x128xf32>
      %271 = arith.mulf %270, %arg9 : vector<8x128xf32>
      %272 = arith.addf %267, %271 : vector<8x128xf32>
      %c2_142 = arith.constant 2 : index
      %c2_143 = arith.constant 2 : index
      %273 = arith.index_cast %3 : i32 to index
      %c0_144 = arith.constant 0 : index
      %274 = vector.load %arg1[%c2_142, %c2_143, %273, %c0_144] : memref<3x3x8x128xf32, #tpu.memory_space<vmem>>, vector<1x1x8x128xf32>
      %275 = vector.shape_cast %274 : vector<1x1x8x128xf32> to vector<8x128xf32>
      %276 = arith.mulf %275, %arg12 : vector<8x128xf32>
      %277 = arith.addf %272, %276 : vector<8x128xf32>
      %278 = arith.mulf %arg5, %249 : vector<8x128xf32>
      %279 = arith.mulf %arg6, %263 : vector<8x128xf32>
      %280 = arith.addf %278, %279 : vector<8x128xf32>
      %281 = arith.mulf %arg7, %277 : vector<8x128xf32>
      %282 = arith.addf %280, %281 : vector<8x128xf32>
      %cst_145 = arith.constant 2.000000e+00 : f32
      %283 = vector.broadcast %cst_145 : f32 to vector<8x128xf32>
      %284 = arith.mulf %283, %arg6 : vector<8x128xf32>
      %285 = arith.subf %284, %282 : vector<8x128xf32>
      %286 = arith.mulf %arg8, %249 : vector<8x128xf32>
      %287 = arith.mulf %arg9, %263 : vector<8x128xf32>
      %288 = arith.addf %286, %287 : vector<8x128xf32>
      %289 = arith.mulf %arg10, %277 : vector<8x128xf32>
      %290 = arith.addf %288, %289 : vector<8x128xf32>
      %cst_146 = arith.constant 2.000000e+00 : f32
      %291 = vector.broadcast %cst_146 : f32 to vector<8x128xf32>
      %292 = arith.mulf %291, %arg9 : vector<8x128xf32>
      %293 = arith.subf %292, %290 : vector<8x128xf32>
      %294 = arith.mulf %arg11, %249 : vector<8x128xf32>
      %295 = arith.mulf %arg12, %263 : vector<8x128xf32>
      %296 = arith.addf %294, %295 : vector<8x128xf32>
      %297 = arith.mulf %arg13, %277 : vector<8x128xf32>
      %298 = arith.addf %296, %297 : vector<8x128xf32>
      %cst_147 = arith.constant 2.000000e+00 : f32
      %299 = vector.broadcast %cst_147 : f32 to vector<8x128xf32>
      %300 = arith.mulf %299, %arg12 : vector<8x128xf32>
      %301 = arith.subf %300, %298 : vector<8x128xf32>
      %c0_148 = arith.constant 0 : index
      %c0_149 = arith.constant 0 : index
      %302 = arith.index_cast %3 : i32 to index
      %c0_150 = arith.constant 0 : index
      %303 = vector.load %arg1[%c0_148, %c0_149, %302, %c0_150] : memref<3x3x8x128xf32, #tpu.memory_space<vmem>>, vector<1x1x8x128xf32>
      %304 = vector.shape_cast %303 : vector<1x1x8x128xf32> to vector<8x128xf32>
      %305 = arith.mulf %304, %arg7 : vector<8x128xf32>
      %c0_151 = arith.constant 0 : index
      %c1_152 = arith.constant 1 : index
      %306 = arith.index_cast %3 : i32 to index
      %c0_153 = arith.constant 0 : index
      %307 = vector.load %arg1[%c0_151, %c1_152, %306, %c0_153] : memref<3x3x8x128xf32, #tpu.memory_space<vmem>>, vector<1x1x8x128xf32>
      %308 = vector.shape_cast %307 : vector<1x1x8x128xf32> to vector<8x128xf32>
      %309 = arith.mulf %308, %arg10 : vector<8x128xf32>
      %310 = arith.addf %305, %309 : vector<8x128xf32>
      %c0_154 = arith.constant 0 : index
      %c2_155 = arith.constant 2 : index
      %311 = arith.index_cast %3 : i32 to index
      %c0_156 = arith.constant 0 : index
      %312 = vector.load %arg1[%c0_154, %c2_155, %311, %c0_156] : memref<3x3x8x128xf32, #tpu.memory_space<vmem>>, vector<1x1x8x128xf32>
      %313 = vector.shape_cast %312 : vector<1x1x8x128xf32> to vector<8x128xf32>
      %314 = arith.mulf %313, %arg13 : vector<8x128xf32>
      %315 = arith.addf %310, %314 : vector<8x128xf32>
      %c1_157 = arith.constant 1 : index
      %c0_158 = arith.constant 0 : index
      %316 = arith.index_cast %3 : i32 to index
      %c0_159 = arith.constant 0 : index
      %317 = vector.load %arg1[%c1_157, %c0_158, %316, %c0_159] : memref<3x3x8x128xf32, #tpu.memory_space<vmem>>, vector<1x1x8x128xf32>
      %318 = vector.shape_cast %317 : vector<1x1x8x128xf32> to vector<8x128xf32>
      %319 = arith.mulf %318, %arg7 : vector<8x128xf32>
      %c1_160 = arith.constant 1 : index
      %c1_161 = arith.constant 1 : index
      %320 = arith.index_cast %3 : i32 to index
      %c0_162 = arith.constant 0 : index
      %321 = vector.load %arg1[%c1_160, %c1_161, %320, %c0_162] : memref<3x3x8x128xf32, #tpu.memory_space<vmem>>, vector<1x1x8x128xf32>
      %322 = vector.shape_cast %321 : vector<1x1x8x128xf32> to vector<8x128xf32>
      %323 = arith.mulf %322, %arg10 : vector<8x128xf32>
      %324 = arith.addf %319, %323 : vector<8x128xf32>
      %c1_163 = arith.constant 1 : index
      %c2_164 = arith.constant 2 : index
      %325 = arith.index_cast %3 : i32 to index
      %c0_165 = arith.constant 0 : index
      %326 = vector.load %arg1[%c1_163, %c2_164, %325, %c0_165] : memref<3x3x8x128xf32, #tpu.memory_space<vmem>>, vector<1x1x8x128xf32>
      %327 = vector.shape_cast %326 : vector<1x1x8x128xf32> to vector<8x128xf32>
      %328 = arith.mulf %327, %arg13 : vector<8x128xf32>
      %329 = arith.addf %324, %328 : vector<8x128xf32>
      %c2_166 = arith.constant 2 : index
      %c0_167 = arith.constant 0 : index
      %330 = arith.index_cast %3 : i32 to index
      %c0_168 = arith.constant 0 : index
      %331 = vector.load %arg1[%c2_166, %c0_167, %330, %c0_168] : memref<3x3x8x128xf32, #tpu.memory_space<vmem>>, vector<1x1x8x128xf32>
      %332 = vector.shape_cast %331 : vector<1x1x8x128xf32> to vector<8x128xf32>
      %333 = arith.mulf %332, %arg7 : vector<8x128xf32>
      %c2_169 = arith.constant 2 : index
      %c1_170 = arith.constant 1 : index
      %334 = arith.index_cast %3 : i32 to index
      %c0_171 = arith.constant 0 : index
      %335 = vector.load %arg1[%c2_169, %c1_170, %334, %c0_171] : memref<3x3x8x128xf32, #tpu.memory_space<vmem>>, vector<1x1x8x128xf32>
      %336 = vector.shape_cast %335 : vector<1x1x8x128xf32> to vector<8x128xf32>
      %337 = arith.mulf %336, %arg10 : vector<8x128xf32>
      %338 = arith.addf %333, %337 : vector<8x128xf32>
      %c2_172 = arith.constant 2 : index
      %c2_173 = arith.constant 2 : index
      %339 = arith.index_cast %3 : i32 to index
      %c0_174 = arith.constant 0 : index
      %340 = vector.load %arg1[%c2_172, %c2_173, %339, %c0_174] : memref<3x3x8x128xf32, #tpu.memory_space<vmem>>, vector<1x1x8x128xf32>
      %341 = vector.shape_cast %340 : vector<1x1x8x128xf32> to vector<8x128xf32>
      %342 = arith.mulf %341, %arg13 : vector<8x128xf32>
      %343 = arith.addf %338, %342 : vector<8x128xf32>
      %344 = arith.mulf %arg5, %315 : vector<8x128xf32>
      %345 = arith.mulf %arg6, %329 : vector<8x128xf32>
      %346 = arith.addf %344, %345 : vector<8x128xf32>
      %347 = arith.mulf %arg7, %343 : vector<8x128xf32>
      %348 = arith.addf %346, %347 : vector<8x128xf32>
      %cst_175 = arith.constant 2.000000e+00 : f32
      %349 = vector.broadcast %cst_175 : f32 to vector<8x128xf32>
      %350 = arith.mulf %349, %arg7 : vector<8x128xf32>
      %351 = arith.subf %350, %348 : vector<8x128xf32>
      %352 = arith.mulf %arg8, %315 : vector<8x128xf32>
      %353 = arith.mulf %arg9, %329 : vector<8x128xf32>
      %354 = arith.addf %352, %353 : vector<8x128xf32>
      %355 = arith.mulf %arg10, %343 : vector<8x128xf32>
      %356 = arith.addf %354, %355 : vector<8x128xf32>
      %cst_176 = arith.constant 2.000000e+00 : f32
      %357 = vector.broadcast %cst_176 : f32 to vector<8x128xf32>
      %358 = arith.mulf %357, %arg10 : vector<8x128xf32>
      %359 = arith.subf %358, %356 : vector<8x128xf32>
      %360 = arith.mulf %arg11, %315 : vector<8x128xf32>
      %361 = arith.mulf %arg12, %329 : vector<8x128xf32>
      %362 = arith.addf %360, %361 : vector<8x128xf32>
      %363 = arith.mulf %arg13, %343 : vector<8x128xf32>
      %364 = arith.addf %362, %363 : vector<8x128xf32>
      %cst_177 = arith.constant 2.000000e+00 : f32
      %365 = vector.broadcast %cst_177 : f32 to vector<8x128xf32>
      %366 = arith.mulf %365, %arg13 : vector<8x128xf32>
      %367 = arith.subf %366, %364 : vector<8x128xf32>
      scf.yield %219, %285, %351, %227, %293, %359, %235, %301, %367 : vector<8x128xf32>, vector<8x128xf32>, vector<8x128xf32>, vector<8x128xf32>, vector<8x128xf32>, vector<8x128xf32>, vector<8x128xf32>, vector<8x128xf32>, vector<8x128xf32>
    }
    %c0_54 = arith.constant 0 : index
    %98 = arith.index_cast %3 : i32 to index
    %c0_55 = arith.constant 0 : index
    %99 = vector.load %arg2[%c0_54, %98, %c0_55] : memref<3x8x128xf32, #tpu.memory_space<vmem>>, vector<1x8x128xf32>
    %100 = vector.shape_cast %99 : vector<1x8x128xf32> to vector<8x128xf32>
    %cst_56 = arith.constant 5.000000e-01 : f32
    %101 = vector.broadcast %cst_56 : f32 to vector<8x128xf32>
    %102 = arith.subf %100, %101 : vector<8x128xf32>
    %103 = arith.mulf %97#0, %102 : vector<8x128xf32>
    %c1_57 = arith.constant 1 : index
    %104 = arith.index_cast %3 : i32 to index
    %c0_58 = arith.constant 0 : index
    %105 = vector.load %arg2[%c1_57, %104, %c0_58] : memref<3x8x128xf32, #tpu.memory_space<vmem>>, vector<1x8x128xf32>
    %106 = vector.shape_cast %105 : vector<1x8x128xf32> to vector<8x128xf32>
    %cst_59 = arith.constant 5.000000e-01 : f32
    %107 = vector.broadcast %cst_59 : f32 to vector<8x128xf32>
    %108 = arith.subf %106, %107 : vector<8x128xf32>
    %109 = arith.mulf %97#1, %108 : vector<8x128xf32>
    %110 = arith.addf %103, %109 : vector<8x128xf32>
    %c2_60 = arith.constant 2 : index
    %111 = arith.index_cast %3 : i32 to index
    %c0_61 = arith.constant 0 : index
    %112 = vector.load %arg2[%c2_60, %111, %c0_61] : memref<3x8x128xf32, #tpu.memory_space<vmem>>, vector<1x8x128xf32>
    %113 = vector.shape_cast %112 : vector<1x8x128xf32> to vector<8x128xf32>
    %cst_62 = arith.constant 5.000000e-01 : f32
    %114 = vector.broadcast %cst_62 : f32 to vector<8x128xf32>
    %115 = arith.subf %113, %114 : vector<8x128xf32>
    %116 = arith.mulf %97#2, %115 : vector<8x128xf32>
    %117 = arith.addf %110, %116 : vector<8x128xf32>
    %c0_63 = arith.constant 0 : index
    %118 = arith.index_cast %3 : i32 to index
    %c0_64 = arith.constant 0 : index
    %119 = vector.load %arg3[%c0_63, %118, %c0_64] : memref<3x8x128xf32, #tpu.memory_space<vmem>>, vector<1x8x128xf32>
    %120 = vector.shape_cast %119 : vector<1x8x128xf32> to vector<8x128xf32>
    %121 = vector.shape_cast %117 : vector<8x128xf32> to vector<1x8x128xf32>
    tpu.vector_store %arg3[%c0_63, %118, %c0_64], %121 {strides = array<i32>} : memref<3x8x128xf32, #tpu.memory_space<vmem>>, vector<1x8x128xf32>,
    %c0_65 = arith.constant 0 : index
    %122 = arith.index_cast %3 : i32 to index
    %c0_66 = arith.constant 0 : index
    %123 = vector.load %arg2[%c0_65, %122, %c0_66] : memref<3x8x128xf32, #tpu.memory_space<vmem>>, vector<1x8x128xf32>
    %124 = vector.shape_cast %123 : vector<1x8x128xf32> to vector<8x128xf32>
    %cst_67 = arith.constant 5.000000e-01 : f32
    %125 = vector.broadcast %cst_67 : f32 to vector<8x128xf32>
    %126 = arith.subf %124, %125 : vector<8x128xf32>
    %127 = arith.mulf %97#3, %126 : vector<8x128xf32>
    %c1_68 = arith.constant 1 : index
    %128 = arith.index_cast %3 : i32 to index
    %c0_69 = arith.constant 0 : index
    %129 = vector.load %arg2[%c1_68, %128, %c0_69] : memref<3x8x128xf32, #tpu.memory_space<vmem>>, vector<1x8x128xf32>
    %130 = vector.shape_cast %129 : vector<1x8x128xf32> to vector<8x128xf32>
    %cst_70 = arith.constant 5.000000e-01 : f32
    %131 = vector.broadcast %cst_70 : f32 to vector<8x128xf32>
    %132 = arith.subf %130, %131 : vector<8x128xf32>
    %133 = arith.mulf %97#4, %132 : vector<8x128xf32>
    %134 = arith.addf %127, %133 : vector<8x128xf32>
    %c2_71 = arith.constant 2 : index
    %135 = arith.index_cast %3 : i32 to index
    %c0_72 = arith.constant 0 : index
    %136 = vector.load %arg2[%c2_71, %135, %c0_72] : memref<3x8x128xf32, #tpu.memory_space<vmem>>, vector<1x8x128xf32>
    %137 = vector.shape_cast %136 : vector<1x8x128xf32> to vector<8x128xf32>
    %cst_73 = arith.constant 5.000000e-01 : f32
    %138 = vector.broadcast %cst_73 : f32 to vector<8x128xf32>
    %139 = arith.subf %137, %138 : vector<8x128xf32>
    %140 = arith.mulf %97#5, %139 : vector<8x128xf32>
    %141 = arith.addf %134, %140 : vector<8x128xf32>
    %c1_74 = arith.constant 1 : index
    %142 = arith.index_cast %3 : i32 to index
    %c0_75 = arith.constant 0 : index
    %143 = vector.load %arg3[%c1_74, %142, %c0_75] : memref<3x8x128xf32, #tpu.memory_space<vmem>>, vector<1x8x128xf32>
    %144 = vector.shape_cast %143 : vector<1x8x128xf32> to vector<8x128xf32>
    %145 = vector.shape_cast %141 : vector<8x128xf32> to vector<1x8x128xf32>
    tpu.vector_store %arg3[%c1_74, %142, %c0_75], %145 {strides = array<i32>} : memref<3x8x128xf32, #tpu.memory_space<vmem>>, vector<1x8x128xf32>,
    %c0_76 = arith.constant 0 : index
    %146 = arith.index_cast %3 : i32 to index
    %c0_77 = arith.constant 0 : index
    %147 = vector.load %arg2[%c0_76, %146, %c0_77] : memref<3x8x128xf32, #tpu.memory_space<vmem>>, vector<1x8x128xf32>
    %148 = vector.shape_cast %147 : vector<1x8x128xf32> to vector<8x128xf32>
    %cst_78 = arith.constant 5.000000e-01 : f32
    %149 = vector.broadcast %cst_78 : f32 to vector<8x128xf32>
    %150 = arith.subf %148, %149 : vector<8x128xf32>
    %151 = arith.mulf %97#6, %150 : vector<8x128xf32>
    %c1_79 = arith.constant 1 : index
    %152 = arith.index_cast %3 : i32 to index
    %c0_80 = arith.constant 0 : index
    %153 = vector.load %arg2[%c1_79, %152, %c0_80] : memref<3x8x128xf32, #tpu.memory_space<vmem>>, vector<1x8x128xf32>
    %154 = vector.shape_cast %153 : vector<1x8x128xf32> to vector<8x128xf32>
    %cst_81 = arith.constant 5.000000e-01 : f32
    %155 = vector.broadcast %cst_81 : f32 to vector<8x128xf32>
    %156 = arith.subf %154, %155 : vector<8x128xf32>
    %157 = arith.mulf %97#7, %156 : vector<8x128xf32>
    %158 = arith.addf %151, %157 : vector<8x128xf32>
    %c2_82 = arith.constant 2 : index
    %159 = arith.index_cast %3 : i32 to index
    %c0_83 = arith.constant 0 : index
    %160 = vector.load %arg2[%c2_82, %159, %c0_83] : memref<3x8x128xf32, #tpu.memory_space<vmem>>, vector<1x8x128xf32>
    %161 = vector.shape_cast %160 : vector<1x8x128xf32> to vector<8x128xf32>
    %cst_84 = arith.constant 5.000000e-01 : f32
    %162 = vector.broadcast %cst_84 : f32 to vector<8x128xf32>
    %163 = arith.subf %161, %162 : vector<8x128xf32>
    %164 = arith.mulf %97#8, %163 : vector<8x128xf32>
    %165 = arith.addf %158, %164 : vector<8x128xf32>
    %c2_85 = arith.constant 2 : index
    %166 = arith.index_cast %3 : i32 to index
    %c0_86 = arith.constant 0 : index
    %167 = vector.load %arg3[%c2_85, %166, %c0_86] : memref<3x8x128xf32, #tpu.memory_space<vmem>>, vector<1x8x128xf32>
    %168 = vector.shape_cast %167 : vector<1x8x128xf32> to vector<8x128xf32>
    %169 = vector.shape_cast %165 : vector<8x128xf32> to vector<1x8x128xf32>
    tpu.vector_store %arg3[%c2_85, %166, %c0_86], %169 {strides = array<i32>} : memref<3x8x128xf32, #tpu.memory_space<vmem>>, vector<1x8x128xf32>,
    %c1_i32_87 = arith.constant 1 : i32
    return
  }
  func.func @transform_0(%arg0: i32) -> (i32, i32, i32, i32) {
    %c0_i32 = arith.constant 0 : i32
    %c0_i32_0 = arith.constant 0 : i32
    %c0_i32_1 = arith.constant 0 : i32
    %c0_i32_2 = arith.constant 0 : i32
    return %c0_i32, %c0_i32_0, %arg0, %c0_i32_1 : i32, i32, i32, i32
  }
  func.func @transform_1(%arg0: i32) -> (i32, i32, i32) {
    %c0_i32 = arith.constant 0 : i32
    %c0_i32_0 = arith.constant 0 : i32
    %c0_i32_1 = arith.constant 0 : i32
    return %c0_i32, %arg0, %c0_i32_0 : i32, i32, i32
  }
  func.func @transform_2(%arg0: i32) -> (i32, i32, i32) {
    %c0_i32 = arith.constant 0 : i32
    %c0_i32_0 = arith.constant 0 : i32
    %c0_i32_1 = arith.constant 0 : i32
    return %c0_i32, %arg0, %c0_i32_0 : i32, i32, i32
  }
}

</mosaic_0001>

<llo_original>
// kernel: tpu_custom_call.1
$region0: #{tpu_custom_call.1}
  #allocation0 [shape = 'u32[]', space=smem, size = 0x4, offset = 0x4, fixed_abs, tag = 'smem constant byte address 0x4 - core index']
  #allocation1 [shape = 'u32[144,128]{1,0:T(1,128)}', space=vmem, size = 0x12000, scoped, tag = 'internal scratch']
  %s0 = inlined_call_operand.hbm [shape: f32[3,3,16,128], index: 0, kind: input, shape index: {}]
  %s1 = inlined_call_operand.hbm [shape: f32[3,16,128], index: 1, kind: input, shape index: {}]
  %s2 = inlined_call_operand.hbm [shape: f32[3,16,128], index: 2, kind: output, shape index: {}]
  %s3 = sld [smem:[#allocation0]]
  $region56: #{tpu_custom_call.1} parent=0
    _
  %s5 = ssub.s32 1, %s3
  %s6 = scalar_select 0, %s5, %s3
  $region1: #{tpu_custom_call.1} parent=0
    #allocation2 [shape = 'u8[73728]{0}', space=vmem, size = 0x12000, scoped, tag = 'input window, operand 0']
    #allocation3 [shape = 's32[2]{0}', space=sflag, size = 0x8, scoped, tag = 'scoped memory for tpu_custom_call.1']
    #allocation4 [shape = 's32[2]{0}', space=sflag, size = 0x8, scoped, tag = 'scoped memory for tpu_custom_call.1']
    #allocation5 [shape = 'u8[24576]{0}', space=vmem, size = 0x6000, scoped, tag = 'input window, operand 1']
    #allocation6 [shape = 's32[2]{0}', space=sflag, size = 0x8, scoped, tag = 'scoped memory for tpu_custom_call.1']
    #allocation7 [shape = 'u8[24576]{0}', space=vmem, size = 0x6000, scoped, tag = 'output window, operand 0']
    %7 = vsyncpa [#allocation3], 0
    %s8 = scalar_lea.sflag [#allocation3], 1
    %9 = vsyncpa %s8, 0
    %10 = vsyncpa [#allocation6], 0
    %s11 = scalar_lea.sflag [#allocation6], 1
    %12 = vsyncpa %s11, 0
    %13 = vsyncpa [#allocation4], 0
    %s14 = scalar_lea.sflag [#allocation4], 1
    %15 = vsyncpa %s14, 0
    loop: start=0, step=1, limit=4
    $region2: #{tpu_custom_call.1} parent=1 // loop_pre_header
      _
    $region3: #{tpu_custom_call.1} parent=1 // loop_header
      %s17 = sphi 0, %s21
      %p18 = scmp.ge.s32.totalorder %s17, 4
      %s27 = sphi 0, %s29
      %s30 = sphi 0, %s27
      %s31 = sphi 0, %s30
      %s47 = sphi 0, %s31
      %s53 = sphi 0, %s55
      %s56 = sphi 0, %s53
      %s57 = sphi 0, %s56
      %s73 = sphi 0, %s57
      %s79 = sphi 0, %s81
      %s82 = sphi 0, %s79
      %s83 = sphi 0, %s82
      %s99 = sphi 0, %s83
    $region4: #{tpu_custom_call.1} parent=1 // loop_header_branch
      %20 = sbr.rel (%p18) target = $region8
    $region5: #{tpu_custom_call.1} parent=1 // loop_body
      %s22 = ssub.s32 %s17, 1
      %s23 = ssub.s32 %s17, 2
      %s24 = sadd.s32 %s17, 1
      %s25 = ssub.s32 %s17, %s24
      %p26 = scmp.eq.s32.totalorder %s25, 0
      %s28 = sadd.s32 %s27, 1
      %s29 = scalar_select %p26, %s27, %s28
      %p32 = pneg %p26
      %p33 = scmp.eq.s32.totalorder %s17, 1
      %p34 = por %p32, %p33
      %p35 = scmp.ne.s32.totalorder %s27, %s30
      %p36 = scmp.eq.s32.totalorder %s17, 0
      %p37 = por %p35, %p36
      %p38 = scmp.ne.s32.totalorder %s27, %s30
      %p39 = scmp.eq.s32.totalorder %s22, 1
      %p40 = por %p38, %p39
      %p41 = scmp.ne.s32.totalorder %s30, %s31
      %p42 = scmp.eq.s32.totalorder %s22, 0
      %p43 = por %p41, %p42
      %p44 = scmp.ne.s32.totalorder %s30, %s31
      %p45 = scmp.eq.s32.totalorder %s23, 1
      %p46 = por %p44, %p45
      %p48 = scmp.ne.s32.totalorder %s31, %s47
      %p49 = scmp.eq.s32.totalorder %s23, 0
      %p50 = por %p48, %p49
      %s51 = ssub.s32 %s17, %s24
      %p52 = scmp.eq.s32.totalorder %s51, 0
      %s54 = sadd.s32 %s53, 1
      %s55 = scalar_select %p52, %s53, %s54
      %p58 = pneg %p52
      %p59 = scmp.eq.s32.totalorder %s17, 1
      %p60 = por %p58, %p59
      %p61 = scmp.ne.s32.totalorder %s53, %s56
      %p62 = scmp.eq.s32.totalorder %s17, 0
      %p63 = por %p61, %p62
      %p64 = scmp.ne.s32.totalorder %s53, %s56
      %p65 = scmp.eq.s32.totalorder %s22, 1
      %p66 = por %p64, %p65
      %p67 = scmp.ne.s32.totalorder %s56, %s57
      %p68 = scmp.eq.s32.totalorder %s22, 0
      %p69 = por %p67, %p68
      %p70 = scmp.ne.s32.totalorder %s56, %s57
      %p71 = scmp.eq.s32.totalorder %s23, 1
      %p72 = por %p70, %p71
      %p74 = scmp.ne.s32.totalorder %s57, %s73
      %p75 = scmp.eq.s32.totalorder %s23, 0
      %p76 = por %p74, %p75
      %s77 = ssub.s32 %s17, %s24
      %p78 = scmp.eq.s32.totalorder %s77, 0
      %s80 = sadd.s32 %s79, 1
      %s81 = scalar_select %p78, %s79, %s80
      %p84 = pneg %p78
      %p85 = scmp.eq.s32.totalorder %s17, 1
      %p86 = por %p84, %p85
      %p87 = scmp.ne.s32.totalorder %s79, %s82
      %p88 = scmp.eq.s32.totalorder %s17, 0
      %p89 = por %p87, %p88
      %p90 = scmp.ne.s32.totalorder %s79, %s82
      %p91 = scmp.eq.s32.totalorder %s22, 1
      %p92 = por %p90, %p91
      %p93 = scmp.ne.s32.totalorder %s82, %s83
      %p94 = scmp.eq.s32.totalorder %s22, 0
      %p95 = por %p93, %p94
      %p96 = scmp.ne.s32.totalorder %s82, %s83
      %p97 = scmp.eq.s32.totalorder %s23, 1
      %p98 = por %p96, %p97
      %p100 = scmp.ne.s32.totalorder %s83, %s99
      %p101 = scmp.eq.s32.totalorder %s23, 0
      %p102 = por %p100, %p101
      %p103 = scmp.le.s32.totalorder 1, %s17
      %p104 = scmp.lt.s32.totalorder %s17, 3
      %p105 = pnand %p103, %p104
      %p106 = pneg %p105
      // Predicated region
      $region9: #{tpu_custom_call.1} parent=5 // pred_check
        _
      $region10: #{tpu_custom_call.1} parent=5 // pred_check_branch
        %108 = sbr.rel (%p105) target = $region12
      $region11: #{tpu_custom_call.1} parent=5 // pred_region
        %s109 = ssub.s32 %s17, 1
      $region12: #{tpu_custom_call.1} parent=5 // pred_fallthru
        _
      %p110 = scmp.lt.s32.totalorder %s17, 2
      // Predicated region
      $region13: #{tpu_custom_call.1} parent=5 // pred_check
        %p111 = pneg %p110
      $region14: #{tpu_custom_call.1} parent=5 // pred_check_branch
        %113 = sbr.rel (%p111) target = $region16
      $region15: #{tpu_custom_call.1} parent=5 // pred_region
        // Predicated region
        $region17: #{tpu_custom_call.1} parent=15 // pred_check
          %p114 = pneg %p37
        $region18: #{tpu_custom_call.1} parent=15 // pred_check_branch
          %116 = sbr.rel (%p114) target = $region20
        $region19: #{tpu_custom_call.1} parent=15 // pred_region
          %s117 = sand.u32 %s27, 1
          %s118 = scalar_lea.sflag [#allocation3], %s117
          %s119 = sand.u32 %s27, 1
          %s120 = smul.addr %s119, 72
          %s121 = scalar_lea.vmem [#allocation2], %s120
          %s123 = ssub.s32 1152, 1152
          %124 = vsyncadd %s118, %s123
          %s125 = smul.addr %s17, 128
          %s126 = scalar_lea.hbm %s0, %s125
          %s127 = sshll.u32 %s121, 4
          %s128 = int_to_ptr.vmem [resolvable:$true] %s127
          %133 = dma.hbm_to_vmem [thread:$0]  %s126, 1152, %s128, %s118, 256, 128, 8
        $region20: #{tpu_custom_call.1} parent=15 // pred_fallthru
          _
        // Predicated region
        $region21: #{tpu_custom_call.1} parent=15 // pred_check
          %p134 = pneg %p63
        $region22: #{tpu_custom_call.1} parent=15 // pred_check_branch
          %136 = sbr.rel (%p134) target = $region24
        $region23: #{tpu_custom_call.1} parent=15 // pred_region
          %s137 = sand.u32 %s53, 1
          %s138 = scalar_lea.sflag [#allocation6], %s137
          %s139 = sand.u32 %s53, 1
          %s140 = smul.addr %s139, 24
          %s141 = scalar_lea.vmem [#allocation5], %s140
          %s143 = ssub.s32 384, 384
          %144 = vsyncadd %s138, %s143
          %s145 = smul.addr %s17, 128
          %s146 = scalar_lea.hbm %s1, %s145
          %s147 = sshll.u32 %s141, 4
          %s148 = int_to_ptr.vmem [resolvable:$true] %s147
          %153 = dma.hbm_to_vmem [thread:$0]  %s146, 384, %s148, %s138, 256, 128, 8
        $region24: #{tpu_custom_call.1} parent=15 // pred_fallthru
          _
      $region16: #{tpu_custom_call.1} parent=5 // pred_fallthru
        _
      %p154 = scmp.le.s32.totalorder 1, %s17
      %p155 = scmp.lt.s32.totalorder %s17, 3
      %p156 = pnand %p154, %p155
      %p157 = pneg %p156
      // Predicated region
      $region25: #{tpu_custom_call.1} parent=5 // pred_check
        _
      $region26: #{tpu_custom_call.1} parent=5 // pred_check_branch
        %159 = sbr.rel (%p156) target = $region28
      $region27: #{tpu_custom_call.1} parent=5 // pred_region
        %s160 = ssub.s32 %s17, 1
        %s161 = sand.u32 %s30, 1
        %s162 = scalar_lea.sflag [#allocation3], %s161
        %s163 = sand.u32 %s30, 1
        %s164 = smul.addr %s163, 72
        %s165 = scalar_lea.vmem [#allocation2], %s164
        // Predicated region
        $region29: #{tpu_custom_call.1} parent=27 // pred_check
          %p166 = pneg %p43
        $region30: #{tpu_custom_call.1} parent=27 // pred_check_branch
          %168 = sbr.rel (%p166) target = $region32
        $region31: #{tpu_custom_call.1} parent=27 // pred_region
          %169 = dma.done %s162, 1152
        $region32: #{tpu_custom_call.1} parent=27 // pred_fallthru
          _
        %s170 = sand.u32 %s56, 1
        %s171 = scalar_lea.sflag [#allocation6], %s170
        %s172 = sand.u32 %s56, 1
        %s173 = smul.addr %s172, 24
        %s174 = scalar_lea.vmem [#allocation5], %s173
        // Predicated region
        $region33: #{tpu_custom_call.1} parent=27 // pred_check
          %p175 = pneg %p69
        $region34: #{tpu_custom_call.1} parent=27 // pred_check_branch
          %177 = sbr.rel (%p175) target = $region36
        $region35: #{tpu_custom_call.1} parent=27 // pred_region
          %178 = dma.done %s171, 384
        $region36: #{tpu_custom_call.1} parent=27 // pred_fallthru
          _
        %s179 = sand.u32 %s30, 1
        %s180 = scalar_lea.sflag [#allocation3], %s179
        %s181 = sand.u32 %s30, 1
        %s182 = smul.addr %s181, 72
        %s183 = scalar_lea.vmem [#allocation2], %s182
        %p184 = pneg %p43
        %p185 = pneg %p40
        %s186 = sand.u32 %s56, 1
        %s187 = scalar_lea.sflag [#allocation6], %s186
        %s188 = sand.u32 %s56, 1
        %s189 = smul.addr %s188, 24
        %s190 = scalar_lea.vmem [#allocation5], %s189
        %p191 = pneg %p69
        %p192 = pneg %p66
        %p193 = pneg %p95
        %p194 = pneg %p92
        %s195 = sand.u32 %s82, 1
        %s196 = scalar_lea.sflag [#allocation4], %s195
        %s197 = sand.u32 %s82, 1
        %s198 = smul.addr %s197, 24
        %s199 = scalar_lea.vmem [#allocation7], %s198
        %v200 = vld [vmem:[%s165] sm:$0xff]
        %v201 = vand.u32 2147483647, %v200
        %s202 = sadd.s32 0, 8
        %s203 = scalar_lea.vmem %s165, %s202 [#allocation2]
        %v204 = vld [vmem:[%s203] sm:$0xff]
        %v205 = vand.u32 2147483647, %v204
        %v206 = vadd.f32 %v201, %v205
        %s207 = sadd.s32 0, 16
        %s208 = scalar_lea.vmem %s165, %s207 [#allocation2]
        %v209 = vld [vmem:[%s208] sm:$0xff]
        %v210 = vand.u32 2147483647, %v209
        %v211 = vadd.f32 %v206, %v210
        %s212 = sadd.s32 0, 24
        %s213 = scalar_lea.vmem %s165, %s212 [#allocation2]
        %v214 = vld [vmem:[%s213] sm:$0xff]
        %v215 = vand.u32 2147483647, %v214
        %v216 = vadd.f32 %v201, %v215
        %s217 = sadd.s32 %s202, 24
        %s218 = scalar_lea.vmem %s165, %s217 [#allocation2]
        %v219 = vld [vmem:[%s218] sm:$0xff]
        %v220 = vand.u32 2147483647, %v219
        %v221 = vadd.f32 %v205, %v220
        %v222 = vadd.f32 %v215, %v220
        %s223 = sadd.s32 %s207, 24
        %s224 = scalar_lea.vmem %s165, %s223 [#allocation2]
        %v225 = vld [vmem:[%s224] sm:$0xff]
        %v226 = vand.u32 2147483647, %v225
        %v227 = vadd.f32 %v210, %v226
        %v228 = vadd.f32 %v222, %v226
        %s229 = sadd.s32 0, 48
        %s230 = scalar_lea.vmem %s165, %s229 [#allocation2]
        %v231 = vld [vmem:[%s230] sm:$0xff]
        %v232 = vand.u32 2147483647, %v231
        %v233 = vadd.f32 %v216, %v232
        %s234 = sadd.s32 %s202, 48
        %s235 = scalar_lea.vmem %s165, %s234 [#allocation2]
        %v236 = vld [vmem:[%s235] sm:$0xff]
        %v237 = vand.u32 2147483647, %v236
        %v238 = vadd.f32 %v221, %v237
        %v239 = vadd.f32 %v232, %v237
        %s240 = sadd.s32 %s207, 48
        %s241 = scalar_lea.vmem %s165, %s240 [#allocation2]
        %v242 = vld [vmem:[%s241] sm:$0xff]
        %v243 = vand.u32 2147483647, %v242
        %v244 = vadd.f32 %v227, %v243
        %v245 = vadd.f32 %v239, %v243
        %v246 = vmax.f32 %v233, %v238
        %v247 = vmax.f32 %v211, %v228
        %v248 = vmax.f32 %v246, %v244
        %v249 = vmax.f32 %v247, %v245
        %v250 = vmul.f32 %v248, %v249
        %v251 = vadd.f32 %v250, 1e-30
        %v252 = vrcp.pop %v251
        %v253 = vmul.f32 %v252, %v200
        %v254 = vmul.f32 %v252, %v214
        %v255 = vmul.f32 %v252, %v231
        %v256 = vmul.f32 %v252, %v204
        %v257 = vmul.f32 %v252, %v219
        %v258 = vmul.f32 %v252, %v236
        %v259 = vmul.f32 %v252, %v209
        %v260 = vmul.f32 %v252, %v225
        %v261 = vmul.f32 %v252, %v242
        loop: start=0, step=1, limit=40
        $region37: #{tpu_custom_call.1} parent=27 // loop_pre_header
          _
        $region38: #{tpu_custom_call.1} parent=27 // loop_header
          %s263 = sphi 0, %s267
          %p264 = scmp.ge.s32.totalorder %s263, 40
          %v268 = vphi %v253, %v307
          %v269 = vphi %v254, %v343
          %v270 = vphi %v255, %v379
          %v271 = vphi %v256, %v314
          %v272 = vphi %v257, %v350
          %v273 = vphi %v258, %v386
          %v274 = vphi %v259, %v321
          %v275 = vphi %v260, %v357
          %v276 = vphi %v261, %v393
        $region39: #{tpu_custom_call.1} parent=27 // loop_header_branch
          %266 = sbr.rel (%p264) target = $region43
        $region40: #{tpu_custom_call.1} parent=27 // loop_body
          %v277 = vld [vmem:[%s165] sm:$0xff]
          %v278 = vmul.f32 %v277, %v268
          %v279 = vld [vmem:[%s203] sm:$0xff]
          %v280 = vmul.f32 %v279, %v271
          %v281 = vadd.f32 %v278, %v280
          %v282 = vld [vmem:[%s208] sm:$0xff]
          %v283 = vmul.f32 %v282, %v274
          %v284 = vadd.f32 %v281, %v283
          %v285 = vld [vmem:[%s213] sm:$0xff]
          %v286 = vmul.f32 %v285, %v268
          %v287 = vld [vmem:[%s218] sm:$0xff]
          %v288 = vmul.f32 %v287, %v271
          %v289 = vadd.f32 %v286, %v288
          %v290 = vld [vmem:[%s224] sm:$0xff]
          %v291 = vmul.f32 %v290, %v274
          %v292 = vadd.f32 %v289, %v291
          %v293 = vld [vmem:[%s230] sm:$0xff]
          %v294 = vmul.f32 %v293, %v268
          %v295 = vld [vmem:[%s235] sm:$0xff]
          %v296 = vmul.f32 %v295, %v271
          %v297 = vadd.f32 %v294, %v296
          %v298 = vld [vmem:[%s241] sm:$0xff]
          %v299 = vmul.f32 %v298, %v274
          %v300 = vadd.f32 %v297, %v299
          %v301 = vmul.f32 %v268, %v284
          %v302 = vmul.f32 %v269, %v292
          %v303 = vadd.f32 %v301, %v302
          %v304 = vmul.f32 %v270, %v300
          %v305 = vadd.f32 %v303, %v304
          %v306 = vmul.f32 %v268, 2.0
          %v307 = vsub.f32 %v306, %v305
          %v308 = vmul.f32 %v271, %v284
          %v309 = vmul.f32 %v272, %v292
          %v310 = vadd.f32 %v308, %v309
          %v311 = vmul.f32 %v273, %v300
          %v312 = vadd.f32 %v310, %v311
          %v313 = vmul.f32 %v271, 2.0
          %v314 = vsub.f32 %v313, %v312
          %v315 = vmul.f32 %v274, %v284
          %v316 = vmul.f32 %v275, %v292
          %v317 = vadd.f32 %v315, %v316
          %v318 = vmul.f32 %v276, %v300
          %v319 = vadd.f32 %v317, %v318
          %v320 = vmul.f32 %v274, 2.0
          %v321 = vsub.f32 %v320, %v319
          %v322 = vmul.f32 %v277, %v269
          %v323 = vmul.f32 %v279, %v272
          %v324 = vadd.f32 %v322, %v323
          %v325 = vmul.f32 %v282, %v275
          %v326 = vadd.f32 %v324, %v325
          %v327 = vmul.f32 %v285, %v269
          %v328 = vmul.f32 %v287, %v272
          %v329 = vadd.f32 %v327, %v328
          %v330 = vmul.f32 %v290, %v275
          %v331 = vadd.f32 %v329, %v330
          %v332 = vmul.f32 %v293, %v269
          %v333 = vmul.f32 %v295, %v272
          %v334 = vadd.f32 %v332, %v333
          %v335 = vmul.f32 %v298, %v275
          %v336 = vadd.f32 %v334, %v335
          %v337 = vmul.f32 %v268, %v326
          %v338 = vmul.f32 %v269, %v331
          %v339 = vadd.f32 %v337, %v338
          %v340 = vmul.f32 %v270, %v336
          %v341 = vadd.f32 %v339, %v340
          %v342 = vmul.f32 %v269, 2.0
          %v343 = vsub.f32 %v342, %v341
          %v344 = vmul.f32 %v271, %v326
          %v345 = vmul.f32 %v272, %v331
          %v346 = vadd.f32 %v344, %v345
          %v347 = vmul.f32 %v273, %v336
          %v348 = vadd.f32 %v346, %v347
          %v349 = vmul.f32 %v272, 2.0
          %v350 = vsub.f32 %v349, %v348
          %v351 = vmul.f32 %v274, %v326
          %v352 = vmul.f32 %v275, %v331
          %v353 = vadd.f32 %v351, %v352
          %v354 = vmul.f32 %v276, %v336
          %v355 = vadd.f32 %v353, %v354
          %v356 = vmul.f32 %v275, 2.0
          %v357 = vsub.f32 %v356, %v355
          %v358 = vmul.f32 %v277, %v270
          %v359 = vmul.f32 %v279, %v273
          %v360 = vadd.f32 %v358, %v359
          %v361 = vmul.f32 %v282, %v276
          %v362 = vadd.f32 %v360, %v361
          %v363 = vmul.f32 %v285, %v270
          %v364 = vmul.f32 %v287, %v273
          %v365 = vadd.f32 %v363, %v364
          %v366 = vmul.f32 %v290, %v276
          %v367 = vadd.f32 %v365, %v366
          %v368 = vmul.f32 %v293, %v270
          %v369 = vmul.f32 %v295, %v273
          %v370 = vadd.f32 %v368, %v369
          %v371 = vmul.f32 %v298, %v276
          %v372 = vadd.f32 %v370, %v371
          %v373 = vmul.f32 %v268, %v362
          %v374 = vmul.f32 %v269, %v367
          %v375 = vadd.f32 %v373, %v374
          %v376 = vmul.f32 %v270, %v372
          %v377 = vadd.f32 %v375, %v376
          %v378 = vmul.f32 %v270, 2.0
          %v379 = vsub.f32 %v378, %v377
          %v380 = vmul.f32 %v271, %v362
          %v381 = vmul.f32 %v272, %v367
          %v382 = vadd.f32 %v380, %v381
          %v383 = vmul.f32 %v273, %v372
          %v384 = vadd.f32 %v382, %v383
          %v385 = vmul.f32 %v273, 2.0
          %v386 = vsub.f32 %v385, %v384
          %v387 = vmul.f32 %v274, %v362
          %v388 = vmul.f32 %v275, %v367
          %v389 = vadd.f32 %v387, %v388
          %v390 = vmul.f32 %v276, %v372
          %v391 = vadd.f32 %v389, %v390
          %v392 = vmul.f32 %v276, 2.0
          %v393 = vsub.f32 %v392, %v391
        $region41: #{tpu_custom_call.1} parent=27 // loop_footer
          %s267 = sadd.s32 1, %s263
        $region42: #{tpu_custom_call.1} parent=27 // loop_footer_branch
          %262 = sbr.rel target = $region38
        $region43: #{tpu_custom_call.1} parent=27 // loop_exit
          _
        %v394 = vld [vmem:[%s174] sm:$0xff]
        %v395 = vsub.f32 %v394, 0.5
        %v396 = vmul.f32 %v268, %v395
        %s397 = scalar_lea.vmem %s174, %s202 [#allocation5]
        %v398 = vld [vmem:[%s397] sm:$0xff]
        %v399 = vsub.f32 %v398, 0.5
        %v400 = vmul.f32 %v269, %v399
        %v401 = vadd.f32 %v396, %v400
        %s402 = scalar_lea.vmem %s174, %s207 [#allocation5]
        %v403 = vld [vmem:[%s402] sm:$0xff]
        %v404 = vsub.f32 %v403, 0.5
        %v405 = vmul.f32 %v270, %v404
        %v406 = vadd.f32 %v401, %v405
        %407 = vst [vmem:[%s199] sm:$0xff] %v406
        %v408 = vld [vmem:[%s174] sm:$0xff]
        %v409 = vsub.f32 %v408, 0.5
        %v410 = vmul.f32 %v271, %v409
        %v411 = vld [vmem:[%s397] sm:$0xff]
        %v412 = vsub.f32 %v411, 0.5
        %v413 = vmul.f32 %v272, %v412
        %v414 = vadd.f32 %v410, %v413
        %v415 = vld [vmem:[%s402] sm:$0xff]
        %v416 = vsub.f32 %v415, 0.5
        %v417 = vmul.f32 %v273, %v416
        %v418 = vadd.f32 %v414, %v417
        %s419 = scalar_lea.vmem %s199, %s202 [#allocation7]
        %420 = vst [vmem:[%s419] sm:$0xff] %v418
        %v421 = vld [vmem:[%s174] sm:$0xff]
        %v422 = vsub.f32 %v421, 0.5
        %v423 = vmul.f32 %v274, %v422
        %v424 = vld [vmem:[%s397] sm:$0xff]
        %v425 = vsub.f32 %v424, 0.5
        %v426 = vmul.f32 %v275, %v425
        %v427 = vadd.f32 %v423, %v426
        %v428 = vld [vmem:[%s402] sm:$0xff]
        %v429 = vsub.f32 %v428, 0.5
        %v430 = vmul.f32 %v276, %v429
        %v431 = vadd.f32 %v427, %v430
        %s432 = scalar_lea.vmem %s199, %s207 [#allocation7]
        %433 = vst [vmem:[%s432] sm:$0xff] %v431
        %s434 = sand.u32 %s82, 1
        %s435 = scalar_lea.sflag [#allocation4], %s434
        %s436 = sand.u32 %s82, 1
        %s437 = smul.addr %s436, 24
        %s438 = scalar_lea.vmem [#allocation7], %s437
        // Predicated region
        $region44: #{tpu_custom_call.1} parent=27 // pred_check
          %p439 = pneg %p92
        $region45: #{tpu_custom_call.1} parent=27 // pred_check_branch
          %441 = sbr.rel (%p439) target = $region47
        $region46: #{tpu_custom_call.1} parent=27 // pred_region
          %s443 = ssub.s32 384, 384
          %444 = vsyncadd %s435, %s443
          %s445 = smul.addr %s22, 128
          %s446 = scalar_lea.hbm %s2, %s445
          %s447 = sshll.u32 %s438, 4
          %s448 = int_to_ptr.vmem [resolvable:$true] %s447
          %453 = dma.vmem_to_hbm [thread:$0]  %s448, 384, %s446, %s435, 128, 256, 8
        $region47: #{tpu_custom_call.1} parent=27 // pred_fallthru
          _
      $region28: #{tpu_custom_call.1} parent=5 // pred_fallthru
        _
      %p454 = scmp.le.s32.totalorder 2, %s17
      // Predicated region
      $region48: #{tpu_custom_call.1} parent=5 // pred_check
        %p455 = pneg %p454
      $region49: #{tpu_custom_call.1} parent=5 // pred_check_branch
        %457 = sbr.rel (%p455) target = $region51
      $region50: #{tpu_custom_call.1} parent=5 // pred_region
        %s458 = ssub.s32 %s17, 2
        // Predicated region
        $region52: #{tpu_custom_call.1} parent=50 // pred_check
          %p459 = pneg %p98
        $region53: #{tpu_custom_call.1} parent=50 // pred_check_branch
          %461 = sbr.rel (%p459) target = $region55
        $region54: #{tpu_custom_call.1} parent=50 // pred_region
          %s462 = sand.u32 %s83, 1
          %s463 = scalar_lea.sflag [#allocation4], %s462
          %s464 = sand.u32 %s83, 1
          %s465 = smul.addr %s464, 24
          %s466 = scalar_lea.vmem [#allocation7], %s465
          %467 = dma.done %s463, 384
        $region55: #{tpu_custom_call.1} parent=50 // pred_fallthru
          _
      $region51: #{tpu_custom_call.1} parent=5 // pred_fallthru
        _
    $region6: #{tpu_custom_call.1} parent=1 // loop_footer
      %s21 = sadd.s32 1, %s17
    $region7: #{tpu_custom_call.1} parent=1 // loop_footer_branch
      %16 = sbr.rel target = $region3
    $region8: #{tpu_custom_call.1} parent=1 // loop_exit
      _
    %468 = vsyncpa [#allocation3], 1
    %s469 = scalar_lea.sflag [#allocation3], 1
    %470 = vsyncpa %s469, 1
    %471 = vsyncpa [#allocation6], 1
    %s472 = scalar_lea.sflag [#allocation6], 1
    %473 = vsyncpa %s472, 1
    %474 = vsyncpa [#allocation4], 1
    %s475 = scalar_lea.sflag [#allocation4], 1
    %476 = vsyncpa %s475, 1

</llo_original>
